<compile_context>
chip_gen: v7x
topology: tpu7x:2x2x1
jax: 0.10.0
libtpu: 0.0.40
codegen_flags: <defaults>
</compile_context>

<pallas_src>
import functools

import jax
import jax.numpy as jnp
from jax.experimental import pallas as pl
from jax.experimental.pallas import tpu as pltpu


def _soft_iou_kernel(pred_ref, label_ref, out_ref, inter_acc, pp_l_acc,
                     *, m_rows, tile_r, need_row_mask):
    k = pl.program_id(0)

    @pl.when(k == 0)
    def _():
        inter_acc[...] = jnp.zeros_like(inter_acc)
        pp_l_acc[...] = jnp.zeros_like(pp_l_acc)

    p = pred_ref[...].astype(jnp.float32)
    l = label_ref[...].astype(jnp.float32)

    if need_row_mask:
        # Tail block: rows >= m_rows are out of bounds -> zero them so the
        # sums are unaffected (OOB block contents are unspecified).
        row = jax.lax.broadcasted_iota(jnp.int32, p.shape, 1) + k * tile_r
        valid = row < m_rows
        p = jnp.where(valid, p, 0.0)
        l = jnp.where(valid, l, 0.0)

    # Pure-VPU elementwise accumulation; the cross-lane reduce is deferred to
    # the final step so the loop-carried dependency stays off the XLU.
    inter_acc[...] += p * l
    pp_l_acc[...] += p * p + l

    @pl.when(k == pl.num_programs(0) - 1)
    def _():
        inter = jnp.sum(jnp.sum(inter_acc[...], axis=1), axis=-1, keepdims=True)  # (B, 1)
        pp_l = jnp.sum(jnp.sum(pp_l_acc[...], axis=1), axis=-1, keepdims=True)    # (B, 1)
        unit = pp_l - inter
        per_batch = 1.0 - inter / (unit + 1e-10)
        out_ref[...] = jnp.mean(per_batch).reshape(1, 1)


def soft_iou_loss(pred, label, *, target_block_elems=256 * 1024):
    """pred, label: arrays with a leading batch dim (e.g. NCHW). Returns a scalar."""
    b = pred.shape[0]
    pred2 = pred.reshape(b, -1)
    label2 = label.reshape(b, -1)
    n = pred2.shape[1]

    # Lane-dense layout: (B, M, 128). Only pad if N isn't a multiple of 128
    # (zeros don't change any of the sums); typical segmentation shapes
    # (C*H*W) already are, so no HBM copy is made in the common case.
    lane_pad = (-n) % 128
    if lane_pad:
        # TODO(synk): mask the lane tail in-kernel instead of materializing a pad.
        pred2 = jnp.pad(pred2, ((0, 0), (0, lane_pad)))
        label2 = jnp.pad(label2, ((0, 0), (0, lane_pad)))
    m = (n + lane_pad) // 128
    pred3 = pred2.reshape(b, m, 128)
    label3 = label2.reshape(b, m, 128)

    # Row-block size: multiple of 8, ~target_block_elems elements per input
    # block (~1 MiB f32 / 0.5 MiB bf16 by default), capped at (rounded-up) M.
    tile_r = max(8, (target_block_elems // (b * 128)) // 8 * 8)
    tile_r = min(tile_r, -(-m // 8) * 8)
    grid_r = -(-m // tile_r)
    need_row_mask = (m % tile_r) != 0

    kernel = functools.partial(
        _soft_iou_kernel, m_rows=m, tile_r=tile_r, need_row_mask=need_row_mask)

    out = pl.pallas_call(
        kernel,
        out_shape=jax.ShapeDtypeStruct((1, 1), jnp.float32),
        grid_spec=pltpu.PrefetchScalarGridSpec(
            num_scalar_prefetch=0,
            grid=(grid_r,),
            in_specs=[
                pl.BlockSpec((b, tile_r, 128), lambda k: (0, k, 0)),
                pl.BlockSpec((b, tile_r, 128), lambda k: (0, k, 0)),
            ],
            out_specs=pl.BlockSpec((1, 1), lambda k: (0, 0)),
            scratch_shapes=[
                pltpu.VMEM((b, tile_r, 128), jnp.float32),   # sum(pred * label)
                pltpu.VMEM((b, tile_r, 128), jnp.float32),   # sum(pred*pred + label)
            ],
        ),
        compiler_params=pltpu.CompilerParams(
            # The grid axis is a sequential reduction carried in VMEM scratch.
            # TODO(synk): on v7x, split the reduction over the 2 TensorCores
            # (per-core partial sums + wrapper combine) instead of one serial axis.
            dimension_semantics=("arbitrary",),
        ),
    )(pred3, label3)
    return out[0, 0]


def _soft_iou_loss_ref(pred, label):
    b = pred.shape[0]
    p = pred.reshape(b, -1).astype(jnp.float32)
    l = label.reshape(b, -1).astype(jnp.float32)
    inter = jnp.sum(p * l, axis=-1)
    unit = jnp.sum(p * p + l, axis=-1) - inter
    return jnp.mean(1.0 - inter / (unit + 1e-10))


if __name__ == "__main__":
    key = jax.random.PRNGKey(0)
    k1, k2 = jax.random.split(key)
    # Small shapes consistent with a segmentation-style loss: NCHW.
    B, C, H, W = 2, 4, 16, 16
    pred = jax.nn.sigmoid(jax.random.normal(k1, (B, C, H, W), dtype=jnp.float32))
    label = (jax.random.uniform(k2, (B, C, H, W)) > 0.5).astype(jnp.float32)

    loss = soft_iou_loss(pred, label)
    jax.block_until_ready(loss)

    ref = _soft_iou_loss_ref(pred, label)
    assert jnp.allclose(loss, ref, rtol=1e-5, atol=1e-6), (loss, ref)

    print("KERNEL_OK")
</pallas_src>

<mosaic_0001>
module attributes {stable_mosaic.version = 11 : i64} {
  func.func @_soft_iou_kernel(%arg0: i32, %arg1: memref<2x8x128xf32, #tpu.memory_space<vmem>>, %arg2: memref<2x8x128xf32, #tpu.memory_space<vmem>>, %arg3: memref<1x1xf32, #tpu.memory_space<vmem>>, %arg4: memref<2x8x128xf32, #tpu.memory_space<vmem>>, %arg5: memref<2x8x128xf32, #tpu.memory_space<vmem>>) attributes {dimension_semantics = [#tpu.dimension_semantics<arbitrary>], iteration_bounds = array<i64: 1>, scalar_prefetch = 0 : i64, scratch_operands = 2 : i64, tpu.core_type = #tpu.core_type<tc>, window_params = [{transform_indices = @transform_0, window_bounds = array<i64: 2, 8, 128>}, {transform_indices = @transform_1, window_bounds = array<i64: 2, 8, 128>}, {pipeline_mode = #tpu.pipeline_mode<synchronous>, transform_indices = @transform_2, window_bounds = array<i64: 1, 1>}]} {
    %c0_i32 = arith.constant 0 : i32
    %0 = arith.cmpi eq, %arg0, %c0_i32 : i32
    %1 = arith.extui %0 : i1 to i32
    %c0_i32_0 = arith.constant 0 : i32
    %2 = arith.cmpi ne, %1, %c0_i32_0 : i32
    scf.if %2 {
      %cst = arith.constant 0.000000e+00 : f32
      %17 = vector.broadcast %cst : f32 to vector<2x8x128xf32>
      %c0_20 = arith.constant 0 : index
      %c0_21 = arith.constant 0 : index
      %c0_22 = arith.constant 0 : index
      %18 = vector.load %arg4[%c0_20, %c0_21, %c0_22] : memref<2x8x128xf32, #tpu.memory_space<vmem>>, vector<2x8x128xf32>
      tpu.vector_store %arg4[%c0_20, %c0_21, %c0_22], %17 {strides = array<i32>} : memref<2x8x128xf32, #tpu.memory_space<vmem>>, vector<2x8x128xf32>,
      %cst_23 = arith.constant 0.000000e+00 : f32
      %19 = vector.broadcast %cst_23 : f32 to vector<2x8x128xf32>
      %c0_24 = arith.constant 0 : index
      %c0_25 = arith.constant 0 : index
      %c0_26 = arith.constant 0 : index
      %20 = vector.load %arg5[%c0_24, %c0_25, %c0_26] : memref<2x8x128xf32, #tpu.memory_space<vmem>>, vector<2x8x128xf32>
      tpu.vector_store %arg5[%c0_24, %c0_25, %c0_26], %19 {strides = array<i32>} : memref<2x8x128xf32, #tpu.memory_space<vmem>>, vector<2x8x128xf32>,
    } else {
    }
    %c0 = arith.constant 0 : index
    %c0_1 = arith.constant 0 : index
    %c0_2 = arith.constant 0 : index
    %3 = vector.load %arg1[%c0, %c0_1, %c0_2] : memref<2x8x128xf32, #tpu.memory_space<vmem>>, vector<2x8x128xf32>
    %c0_3 = arith.constant 0 : index
    %c0_4 = arith.constant 0 : index
    %c0_5 = arith.constant 0 : index
    %4 = vector.load %arg2[%c0_3, %c0_4, %c0_5] : memref<2x8x128xf32, #tpu.memory_space<vmem>>, vector<2x8x128xf32>
    %c0_6 = arith.constant 0 : index
    %c0_7 = arith.constant 0 : index
    %c0_8 = arith.constant 0 : index
    %5 = vector.load %arg4[%c0_6, %c0_7, %c0_8] : memref<2x8x128xf32, #tpu.memory_space<vmem>>, vector<2x8x128xf32>
    %6 = arith.mulf %3, %4 : vector<2x8x128xf32>
    %7 = arith.addf %5, %6 : vector<2x8x128xf32>
    %c0_9 = arith.constant 0 : index
    %c0_10 = arith.constant 0 : index
    %c0_11 = arith.constant 0 : index
    %8 = vector.load %arg4[%c0_9, %c0_10, %c0_11] : memref<2x8x128xf32, #tpu.memory_space<vmem>>, vector<2x8x128xf32>
    tpu.vector_store %arg4[%c0_9, %c0_10, %c0_11], %7 {strides = array<i32>} : memref<2x8x128xf32, #tpu.memory_space<vmem>>, vector<2x8x128xf32>,
    %c0_12 = arith.constant 0 : index
    %c0_13 = arith.constant 0 : index
    %c0_14 = arith.constant 0 : index
    %9 = vector.load %arg5[%c0_12, %c0_13, %c0_14] : memref<2x8x128xf32, #tpu.memory_space<vmem>>, vector<2x8x128xf32>
    %10 = arith.mulf %3, %3 : vector<2x8x128xf32>
    %11 = arith.addf %10, %4 : vector<2x8x128xf32>
    %12 = arith.addf %9, %11 : vector<2x8x128xf32>
    %c0_15 = arith.constant 0 : index
    %c0_16 = arith.constant 0 : index
    %c0_17 = arith.constant 0 : index
    %13 = vector.load %arg5[%c0_15, %c0_16, %c0_17] : memref<2x8x128xf32, #tpu.memory_space<vmem>>, vector<2x8x128xf32>
    tpu.vector_store %arg5[%c0_15, %c0_16, %c0_17], %12 {strides = array<i32>} : memref<2x8x128xf32, #tpu.memory_space<vmem>>, vector<2x8x128xf32>,
    %c0_i32_18 = arith.constant 0 : i32
    %14 = arith.cmpi eq, %arg0, %c0_i32_18 : i32
    %15 = arith.extui %14 : i1 to i32
    %c0_i32_19 = arith.constant 0 : i32
    %16 = arith.cmpi ne, %15, %c0_i32_19 : i32
    scf.if %16 {
      %c0_20 = arith.constant 0 : index
      %c0_21 = arith.constant 0 : index
      %c0_22 = arith.constant 0 : index
      %17 = vector.load %arg4[%c0_20, %c0_21, %c0_22] : memref<2x8x128xf32, #tpu.memory_space<vmem>>, vector<2x8x128xf32>
      %cst = arith.constant dense<0.000000e+00> : vector<2x128xf32>
      %18 = vector.multi_reduction <add>, %17, %cst [1] : vector<2x8x128xf32> to vector<2x128xf32>
      %cst_23 = arith.constant dense<0.000000e+00> : vector<2xf32>
      %19 = vector.multi_reduction <add>, %18, %cst_23 [1] : vector<2x128xf32> to vector<2xf32>
      %20 = vector.shape_cast %19 : vector<2xf32> to vector<2x1xf32>
      %c0_24 = arith.constant 0 : index
      %c0_25 = arith.constant 0 : index
      %c0_26 = arith.constant 0 : index
      %21 = vector.load %arg5[%c0_24, %c0_25, %c0_26] : memref<2x8x128xf32, #tpu.memory_space<vmem>>, vector<2x8x128xf32>
      %cst_27 = arith.constant dense<0.000000e+00> : vector<2x128xf32>
      %22 = vector.multi_reduction <add>, %21, %cst_27 [1] : vector<2x8x128xf32> to vector<2x128xf32>
      %cst_28 = arith.constant dense<0.000000e+00> : vector<2xf32>
      %23 = vector.multi_reduction <add>, %22, %cst_28 [1] : vector<2x128xf32> to vector<2xf32>
      %24 = vector.shape_cast %23 : vector<2xf32> to vector<2x1xf32>
      %25 = arith.subf %24, %20 : vector<2x1xf32>
      %cst_29 = arith.constant 1.000000e-10 : f32
      %26 = vector.broadcast %cst_29 : f32 to vector<2x1xf32>
      %27 = arith.addf %25, %26 : vector<2x1xf32>
      %28 = arith.divf %20, %27 : vector<2x1xf32>
      %cst_30 = arith.constant 1.000000e+00 : f32
      %29 = vector.broadcast %cst_30 : f32 to vector<2x1xf32>
      %30 = arith.subf %29, %28 : vector<2x1xf32>
      %31 = vector.shape_cast %30 : vector<2x1xf32> to vector<1x2x1xf32>
      %cst_31 = arith.constant dense<0.000000e+00> : vector<1xf32>
      %32 = vector.multi_reduction <add>, %31, %cst_31 [1, 2] : vector<1x2x1xf32> to vector<1xf32>
      %33 = vector.shape_cast %32 : vector<1xf32> to vector<1x1x1xf32>
      %34 = vector.extract %33[0, 0, 0] : f32 from vector<1x1x1xf32>
      %cst_32 = arith.constant 2.000000e+00 : f32
      %35 = arith.divf %34, %cst_32 : f32
      %36 = vector.broadcast %35 : f32 to vector<1x1xf32>
      %c0_33 = arith.constant 0 : index
      %c0_34 = arith.constant 0 : index
      %37 = vector.load %arg3[%c0_33, %c0_34] : memref<1x1xf32, #tpu.memory_space<vmem>>, vector<1x1xf32>
      tpu.vector_store %arg3[%c0_33, %c0_34], %36 {strides = array<i32>} : memref<1x1xf32, #tpu.memory_space<vmem>>, vector<1x1xf32>,
    } else {
    }
    return
  }
  func.func @transform_0(%arg0: i32) -> (i32, i32, i32) {
    %c0_i32 = arith.constant 0 : i32
    %c0_i32_0 = arith.constant 0 : i32
    %c0_i32_1 = arith.constant 0 : i32
    return %c0_i32, %arg0, %c0_i32_0 : i32, i32, i32
  }
  func.func @transform_1(%arg0: i32) -> (i32, i32, i32) {
    %c0_i32 = arith.constant 0 : i32
    %c0_i32_0 = arith.constant 0 : i32
    %c0_i32_1 = arith.constant 0 : i32
    return %c0_i32, %arg0, %c0_i32_0 : i32, i32, i32
  }
  func.func @transform_2(%arg0: i32) -> (i32, i32) {
    %c0_i32 = arith.constant 0 : i32
    %c0_i32_0 = arith.constant 0 : i32
    %c0_i32_1 = arith.constant 0 : i32
    return %c0_i32, %c0_i32_0 : i32, i32
  }
}

</mosaic_0001>

<llo_original>
// kernel: tpu_custom_call.1
$region0: #{tpu_custom_call.1}
  #allocation0 [shape = 'u32[]', space=smem, size = 0x4, offset = 0x4, fixed_abs, tag = 'smem constant byte address 0x4 - core index']
  #allocation1 [shape = 'u32[144,128]{1,0:T(1,128)}', space=vmem, size = 0x12000, scoped, tag = 'internal scratch']
  #allocation2 [shape = 'f32[2,8,128]{2,1,0:T(8,128)}', space=vmem, size = 0x2000, scoped, tag = 'scratch operand']
  #allocation3 [shape = 'f32[2,8,128]{2,1,0:T(8,128)}', space=vmem, size = 0x2000, scoped, tag = 'scratch operand']
  %s0 = inlined_call_operand.hbm [shape: f32[2,8,128], index: 0, kind: input, shape index: {}]
  %s1 = inlined_call_operand.hbm [shape: f32[2,8,128], index: 1, kind: input, shape index: {}]
  %s2 = inlined_call_operand.hbm [shape: f32[1,1], index: 2, kind: output, shape index: {}]
  %s3 = sld [smem:[#allocation0]]
  $region34: #{tpu_custom_call.1} parent=0
    _
  %s5 = ssub.s32 1, %s3
  %s6 = scalar_select 0, %s5, %s3
  $region1: #{tpu_custom_call.1} parent=0
    #allocation4 [shape = 'u8[8192]{0}', space=vmem, size = 0x2000, scoped, tag = 'input window, operand 0, single buffered']
    #allocation5 [shape = 's32[1]{0}', space=sflag, size = 0x4, scoped, tag = 'scoped memory for tpu_custom_call.1']
    #allocation6 [shape = 's32[1]{0}', space=sflag, size = 0x4, scoped, tag = 'scoped memory for tpu_custom_call.1']
    #allocation7 [shape = 'u8[8192]{0}', space=vmem, size = 0x2000, scoped, tag = 'input window, operand 1, single buffered']
    #allocation8 [shape = 's32[1]{0}', space=sflag, size = 0x4, scoped, tag = 'scoped memory for tpu_custom_call.1']
    #allocation9 [shape = 'u8[512]{0}', space=vmem, size = 0x400, scoped, tag = 'output window, operand 0, single buffered']
    %7 = vsyncpa [#allocation5], 0
    %8 = vsyncpa [#allocation8], 0
    %9 = vsyncpa [#allocation6], 0
    // Predicated region
    $region2: #{tpu_custom_call.1} parent=1 // pred_check
      _
    $region3: #{tpu_custom_call.1} parent=1 // pred_check_branch
      %11 = sbr.rel (0) target = $region5
    $region4: #{tpu_custom_call.1} parent=1 // pred_region
      %s13 = ssub.s32 256, 256
      %14 = vsyncadd [#allocation5], %s13
      %s15 = sshll.u32 [#allocation4], 4
      %s16 = int_to_ptr.vmem [resolvable:$true] %s15
      %21 = dma.hbm_to_vmem [thread:$0]  %s0, 256, %s16, [#allocation5], 128, 128, 8
    $region5: #{tpu_custom_call.1} parent=1 // pred_fallthru
      _
    // Predicated region
    $region6: #{tpu_custom_call.1} parent=1 // pred_check
      _
    $region7: #{tpu_custom_call.1} parent=1 // pred_check_branch
      %23 = sbr.rel (0) target = $region9
    $region8: #{tpu_custom_call.1} parent=1 // pred_region
      %s25 = ssub.s32 256, 256
      %26 = vsyncadd [#allocation8], %s25
      %s27 = sshll.u32 [#allocation7], 4
      %s28 = int_to_ptr.vmem [resolvable:$true] %s27
      %33 = dma.hbm_to_vmem [thread:$0]  %s1, 256, %s28, [#allocation8], 128, 128, 8
    $region9: #{tpu_custom_call.1} parent=1 // pred_fallthru
      _
    // Predicated region
    $region10: #{tpu_custom_call.1} parent=1 // pred_check
      _
    $region11: #{tpu_custom_call.1} parent=1 // pred_check_branch
      %35 = sbr.rel (0) target = $region13
    $region12: #{tpu_custom_call.1} parent=1 // pred_region
      %36 = dma.done [#allocation5], 256
    $region13: #{tpu_custom_call.1} parent=1 // pred_fallthru
      _
    // Predicated region
    $region14: #{tpu_custom_call.1} parent=1 // pred_check
      _
    $region15: #{tpu_custom_call.1} parent=1 // pred_check_branch
      %38 = sbr.rel (0) target = $region17
    $region16: #{tpu_custom_call.1} parent=1 // pred_region
      %39 = dma.done [#allocation8], 256
    $region17: #{tpu_custom_call.1} parent=1 // pred_fallthru
      _
    %p40 = scmp.eq.s32.totalorder 0, 0
    // Predicated region
    $region18: #{tpu_custom_call.1} parent=1 // pred_check
      %p41 = pneg %p40
    $region19: #{tpu_custom_call.1} parent=1 // pred_check_branch
      %43 = sbr.rel (%p41) target = $region21
    $region20: #{tpu_custom_call.1} parent=1 // pred_region
      %44 = vst [vmem:[#allocation2] sm:$0xff] 0.0
      %45 = vst [vmem:[#allocation2 + $0x8] sm:$0xff] 0.0
      %46 = vst [vmem:[#allocation3] sm:$0xff] 0.0
      %47 = vst [vmem:[#allocation3 + $0x8] sm:$0xff] 0.0
    $region21: #{tpu_custom_call.1} parent=1 // pred_fallthru
      _
    %v48 = vld [vmem:[#allocation4] sm:$0xff]
    %v49 = vld [vmem:[#allocation4 + $0x8] sm:$0xff]
    %v50 = vld [vmem:[#allocation7] sm:$0xff]
    %v51 = vld [vmem:[#allocation7 + $0x8] sm:$0xff]
    %v52 = vld [vmem:[#allocation2] sm:$0xff]
    %v53 = vld [vmem:[#allocation2 + $0x8] sm:$0xff]
    %v54 = vmul.f32 %v48, %v50
    %v55 = vmul.f32 %v49, %v51
    %v56 = vadd.f32 %v52, %v54
    %v57 = vadd.f32 %v53, %v55
    %58 = vst [vmem:[#allocation2] sm:$0xff] %v56
    %59 = vst [vmem:[#allocation2 + $0x8] sm:$0xff] %v57
    %v60 = vld [vmem:[#allocation3] sm:$0xff]
    %v61 = vld [vmem:[#allocation3 + $0x8] sm:$0xff]
    %v62 = vmul.f32 %v48, %v48
    %v63 = vmul.f32 %v49, %v49
    %v64 = vadd.f32 %v62, %v50
    %v65 = vadd.f32 %v63, %v51
    %v66 = vadd.f32 %v60, %v64
    %v67 = vadd.f32 %v61, %v65
    %68 = vst [vmem:[#allocation3] sm:$0xff] %v66
    %69 = vst [vmem:[#allocation3 + $0x8] sm:$0xff] %v67
    // Predicated region
    $region22: #{tpu_custom_call.1} parent=1 // pred_check
      %p70 = pneg %p40
    $region23: #{tpu_custom_call.1} parent=1 // pred_check_branch
      %72 = sbr.rel (%p70) target = $region25
    $region24: #{tpu_custom_call.1} parent=1 // pred_region
      %v73 = vld [vmem:[#allocation2] sm:$0xff]
      %v74 = vld [vmem:[#allocation2 + $0x8] sm:$0xff]
      %v75 = vrot.slane %v73, 4
      %v76 = vadd.f32 %v73, %v75
      %v77 = vrot.slane %v76, 2
      %v78 = vadd.f32 %v76, %v77
      %v79 = vrot.slane %v78, 1
      %v80 = vadd.f32 %v78, %v79
      %v81 = vrot.slane %v74, 4
      %v82 = vadd.f32 %v74, %v81
      %v83 = vrot.slane %v82, 2
      %v84 = vadd.f32 %v82, %v83
      %v85 = vrot.slane %v84, 1
      %v86 = vadd.f32 %v84, %v85
      %vm89 = vcmask 1041409
      %v90 = vsel %vm89, %v86, %v80
      %vm92 = vcmask 1041408
      %v93 = vsel %vm92, %v90, 0.0
      %94 = vadd.xlane.f32.xlu0 %v93
      %v95 = vpop.xlane.xlu0 %94
      %v96 = vld [vmem:[#allocation3] sm:$0xff]
      %v97 = vld [vmem:[#allocation3 + $0x8] sm:$0xff]
      %v98 = vrot.slane %v96, 4
      %v99 = vadd.f32 %v96, %v98
      %v100 = vrot.slane %v99, 2
      %v101 = vadd.f32 %v99, %v100
      %v102 = vrot.slane %v101, 1
      %v103 = vadd.f32 %v101, %v102
      %v104 = vrot.slane %v97, 4
      %v105 = vadd.f32 %v97, %v104
      %v106 = vrot.slane %v105, 2
      %v107 = vadd.f32 %v105, %v106
      %v108 = vrot.slane %v107, 1
      %v109 = vadd.f32 %v107, %v108
      %v112 = vsel %vm89, %v109, %v103
      %v114 = vsel %vm92, %v112, 0.0
      %115 = vadd.xlane.f32.xlu0 %v114
      %v116 = vpop.xlane.xlu0 %115
      %v117 = vsub.f32 %v116, %v95
      %v118 = vadd.f32 %v117, 1e-10
      %v119 = vrcp.pop %v118
      %v120 = vmul.f32 %v95, %v119
      %v121 = vsub.f32 1.0, %v120
      %vm122 = vcmask 1024
      %v123 = vsel %vm122, %v121, 0.0
      %124 = vadd.xlane.f32.xlu0 %v123
      %v125 = vpop.xlane.xlu0 %124
      %v126 = vrot.slane %v125, 4
      %v127 = vadd.f32 %v125, %v126
      %v128 = vrot.slane %v127, 2
      %v129 = vadd.f32 %v127, %v128
      %v130 = vrot.slane %v129, 1
      %v131 = vadd.f32 %v129, %v130
      %s132 = vtos %v131
      %v133 = vrcp.pop 2.0
      %s134 = vtos %v133
      %s135 = smul.f32 %s132, %s134
      %v136 = vstv %s135
      %vm137 = vcmask 0
      %138 = vst.msk [vmem:[#allocation9] sm:$0x1] %vm137, %v136
    $region25: #{tpu_custom_call.1} parent=1 // pred_fallthru
      _
    // Predicated region
    $region26: #{tpu_custom_call.1} parent=1 // pred_check
      _
    $region27: #{tpu_custom_call.1} parent=1 // pred_check_branch
      %140 = sbr.rel (0) target = $region29
    $region28: #{tpu_custom_call.1} parent=1 // pred_region
      %s142 = ssub.s32 16, 16
      %143 = vsyncadd [#allocation6], %s142
      %s145 = sshll.u32 [#allocation9], 4
      %s146 = int_to_ptr.vmem [resolvable:$true] %s145
      %148 = dma.vmem_to_hbm [thread:$0]  %s146, 16, %s2, [#allocation6]
    $region29: #{tpu_custom_call.1} parent=1 // pred_fallthru
      _
    // Predicated region
    $region30: #{tpu_custom_call.1} parent=1 // pred_check
      _
    $region31: #{tpu_custom_call.1} parent=1 // pred_check_branch
      %150 = sbr.rel (0) target = $region33
    $region32: #{tpu_custom_call.1} parent=1 // pred_region
      %151 = dma.done [#allocation6], 16
    $region33: #{tpu_custom_call.1} parent=1 // pred_fallthru
      _
    %152 = vsyncpa [#allocation5], 1
    %153 = vsyncpa [#allocation8], 1
    %154 = vsyncpa [#allocation6], 1

</llo_original>
